<compile_context>
chip_gen: v7x
topology: tpu7x:2x2x1
jax: 0.10.0
libtpu: 0.0.40
codegen_flags: <defaults>
</compile_context>

<pallas_src>
import functools

import jax
import jax.numpy as jnp
from jax import lax
from jax.experimental import pallas as pl
from jax.experimental.pallas import tpu as pltpu


def _round_up(x, m):
    return (x + m - 1) // m * m


def _tap_offsets(wp2):
    # Tap (di, dj) of a 3x3 / stride-2 / pad-1 conv on the parity-decomposed
    # padded input:  plane index = (di % 2) * 2 + (dj % 2), flat element offset
    # (di // 2) * wp2 + (dj // 2) into the (hp2, wp2) row-major plane.
    return tuple(((di % 2) * 2 + (dj % 2), (di // 2) * wp2 + (dj // 2))
                 for di in range(3) for dj in range(3))


def _parity_planes(x_nchw, *, c_pad_to=8, tail_pad=8, out_dtype=jnp.bfloat16):
    """Pad spatially by 1 and space-to-depth by parity.

    Returns (B, 4, Cp, hp2*wp2 + tail) where plane p*2+q holds
    padded_input[2a+p, 2b+q].  One non-amplifying HBM pass (vs. 9x im2col).
    """
    B, C, H, W = x_nchw.shape
    assert H % 2 == 0 and W % 2 == 0
    Cp = _round_up(C, c_pad_to)
    if Cp != C:
        x_nchw = jnp.pad(x_nchw, ((0, 0), (0, Cp - C), (0, 0), (0, 0)))
    xp = jnp.pad(x_nchw, ((0, 0), (0, 0), (1, 1), (1, 1)))
    hp2, wp2 = (H + 2) // 2, (W + 2) // 2
    t = xp.reshape(B, Cp, hp2, 2, wp2, 2)
    t = jnp.transpose(t, (0, 3, 5, 1, 2, 4)).reshape(B, 4, Cp, hp2 * wp2)
    t = jnp.pad(t, ((0, 0), (0, 0), (0, 0), (0, tail_pad)))  # slack for tap views
    return t.astype(out_dtype), hp2, wp2


def _cparams(vmem_need_bytes):
    # Explicit scoped-VMEM budget; keep well under v7x's 64 MiB physical.
    lim = int(min(max(2 * int(vmem_need_bytes), 32 << 20), 56 << 20))
    return pltpu.CompilerParams(dimension_semantics=("parallel",),
                                vmem_limit_bytes=lim)


# ----------------------------------------------------------------------------
# Pallas kernels
# ----------------------------------------------------------------------------
def _conv3x3s2_silu_kernel(x_ref, w_ref, b_ref, o_ref, acc_ref, *, offsets, n):
    # x:   (1, 4, Cin, L)  bf16 parity planes of the padded input (one image)
    # w:   (9, Cout, Cin)  bf16 per-tap weights
    # b:   (Cout, 1)       f32
    # o:   (1, Cout, n)    bf16  -- pixels (lane axis) flattened as y*wp2 + x
    # acc: (Cout, n)       f32 scratch accumulator
    for t, (pidx, off) in enumerate(offsets):
        xt = x_ref[0, pidx, :, off:off + n]               # (Cin, n) shifted view
        pt = jnp.dot(w_ref[t], xt, preferred_element_type=jnp.float32)
        if t == 0:
            acc_ref[...] = pt
        else:
            acc_ref[...] += pt
    z = acc_ref[...] + b_ref[...]
    o_ref[0] = (z * jax.nn.sigmoid(z)).astype(o_ref.dtype)  # SiLU


def _conv_head_decode_kernel(x_ref, w_ref, b_ref, wh_ref, bh_ref, tab_ref,
                             o_ref, acc_ref, *, offsets, n, wp2):
    # Fused: 3x3/s2 conv + SiLU  ->  1x1 head conv  ->  Detect decode.
    # x:   (1, 4, C1, L) bf16   w: (9, C2, C1) bf16   b: (C2, 1) f32
    # wh:  (R, C2) bf16         bh: (R, 1) f32        tab: (R, 8) f32
    # o:   (1, R, n) f32        acc: (C2, n) f32
    for t, (pidx, off) in enumerate(offsets):
        xt = x_ref[0, pidx, :, off:off + n]
        pt = jnp.dot(w_ref[t], xt, preferred_element_type=jnp.float32)
        if t == 0:
            acc_ref[...] = pt
        else:
            acc_ref[...] += pt
    z = acc_ref[...] + b_ref[...]
    a = (z * jax.nn.sigmoid(z)).astype(jnp.bfloat16)          # SiLU, (C2, n)

    # fused 1x1 detection head -- the 32-channel activation never leaves VMEM
    p = jnp.dot(wh_ref[...], a, preferred_element_type=jnp.float32)
    p = p + bh_ref[...]                                        # (R, n)
    s = jax.nn.sigmoid(p)

    # per-pixel grid coords from the flattened (y*wp2 + x) lane index
    col = lax.broadcasted_iota(jnp.float32, (1, n), 1)
    gy = jnp.floor((col + 0.5) * (1.0 / wp2))
    gx = col - gy * float(wp2)

    # affine decode: out = A*s^2 + B*s + C + D*g   (per-row constants)
    A = tab_ref[:, 0:1]
    Bc = tab_ref[:, 1:2]
    C0 = tab_ref[:, 2:3]
    D = tab_ref[:, 3:4]
    is_y = tab_ref[:, 4:5]
    g = jnp.where(is_y > 0.5, gy, gx)
    o_ref[0] = (A * (s * s) + Bc * s + C0 + D * g).astype(o_ref.dtype)


# ----------------------------------------------------------------------------
# Stage wrappers
# ----------------------------------------------------------------------------
def conv3x3_s2_silu(planes, w_taps, b_col, hp2, wp2):
    """3x3 stride-2 conv + bias + SiLU; taps fused in-kernel; grid over batch."""
    B, _, cin, lp = planes.shape
    cout = w_taps.shape[1]
    ho = hp2 - 1
    n = ho * wp2            # one garbage column per row (x == wp2-1), dropped later
    kernel = functools.partial(_conv3x3s2_silu_kernel,
                               offsets=_tap_offsets(wp2), n=n)
    vmem_need = (2 * (4 * cin * lp * 2 + 9 * cout * cin * 2 + cout * 4
                      + cout * n * 2) + cout * n * 4)
    out = pl.pallas_call(
        kernel,
        out_shape=jax.ShapeDtypeStruct((B, cout, n), jnp.bfloat16),
        grid=(B,),
        in_specs=[
            pl.BlockSpec((1, 4, cin, lp), lambda b: (b, 0, 0, 0)),
            pl.BlockSpec((9, cout, cin), lambda b: (0, 0, 0)),
            pl.BlockSpec((cout, 1), lambda b: (0, 0)),
        ],
        out_specs=pl.BlockSpec((1, cout, n), lambda b: (b, 0, 0)),
        scratch_shapes=[pltpu.VMEM((cout, n), jnp.float32)],
        compiler_params=_cparams(vmem_need),
    )(planes, w_taps, b_col)
    return out, ho


def conv3x3_s2_head_decode(planes, w_taps, b_col, wh_mat, bh_col, dec_tab,
                           hp2, wp2):
    """Fused conv2 (+SiLU) + 1x1 head + Detect decode; grid over batch."""
    B, _, cin, lp = planes.shape
    cout = w_taps.shape[1]
    r = wh_mat.shape[0]
    ho = hp2 - 1
    n = ho * wp2
    kernel = functools.partial(_conv_head_decode_kernel,
                               offsets=_tap_offsets(wp2), n=n, wp2=wp2)
    vmem_need = (2 * (4 * cin * lp * 2 + 9 * cout * cin * 2 + cout * 4
                      + r * cout * 2 + r * 4 + r * 8 * 4 + r * n * 4)
                 + cout * n * 4)
    out = pl.pallas_call(
        kernel,
        out_shape=jax.ShapeDtypeStruct((B, r, n), jnp.float32),
        grid=(B,),
        in_specs=[
            pl.BlockSpec((1, 4, cin, lp), lambda b: (b, 0, 0, 0)),
            pl.BlockSpec((9, cout, cin), lambda b: (0, 0, 0)),
            pl.BlockSpec((cout, 1), lambda b: (0, 0)),
            pl.BlockSpec((r, cout), lambda b: (0, 0)),
            pl.BlockSpec((r, 1), lambda b: (0, 0)),
            pl.BlockSpec((r, 8), lambda b: (0, 0)),
        ],
        out_specs=pl.BlockSpec((1, r, n), lambda b: (b, 0, 0)),
        scratch_shapes=[pltpu.VMEM((cout, n), jnp.float32)],
        compiler_params=_cparams(vmem_need),
    )(planes, w_taps, b_col, wh_mat, bh_col, dec_tab)
    return out, ho


# ----------------------------------------------------------------------------
# DetectMultiBackend (pt path) forward
# ----------------------------------------------------------------------------
class DetectMultiBackendPallas:
    def __init__(self, key, nc=2, na=3):
        self.nc = nc
        self.na = na
        self.no = nc + 5
        self.fp16 = False    # default in the reference module
        self.nhwc = False    # pt path -> NCHW input
        self.stride = 4.0    # total stride of the two /2 convs
        k = jax.random.split(key, 6)
        s = 0.05
        self.w1 = s * jax.random.normal(k[0], (16, 3, 3, 3), jnp.float32)
        self.b1 = s * jax.random.normal(k[1], (16,), jnp.float32)
        self.w2 = s * jax.random.normal(k[2], (32, 16, 3, 3), jnp.float32)
        self.b2 = s * jax.random.normal(k[3], (32,), jnp.float32)
        self.wh = s * jax.random.normal(k[4], (na * self.no, 32, 1, 1),
                                        jnp.float32)
        self.bh = s * jax.random.normal(k[5], (na * self.no,), jnp.float32)
        anchors_py = [[10., 13.], [16., 30.], [33., 23.]]
        self.anchor_grid = jnp.array(anchors_py, jnp.float32)

        # --- pre-packed kernel-side parameters (pack once, not per forward) ---
        # per-tap conv weights (tap t = di*3 + dj); conv1 input channels padded to 8
        w1_t = jnp.transpose(self.w1, (2, 3, 0, 1)).reshape(9, 16, 3)
        self.w1_taps = jnp.pad(w1_t, ((0, 0), (0, 0), (0, 5))).astype(jnp.bfloat16)
        self.w2_taps = jnp.transpose(self.w2, (2, 3, 0, 1)).reshape(9, 32, 16
                                                                    ).astype(jnp.bfloat16)
        self.b1_col = self.b1.reshape(16, 1).astype(jnp.float32)
        self.b2_col = self.b2.reshape(32, 1).astype(jnp.float32)
        self.wh_mat = self.wh.reshape(na * self.no, 32).astype(jnp.bfloat16)
        self.bh_col = self.bh.reshape(na * self.no, 1).astype(jnp.float32)

        # per-row affine decode table: out = A*s^2 + B*s + C + D*g
        # columns: [A, B, C, D, is_y, pad, pad, pad]
        tab = []
        for a in range(na):
            for c in range(self.no):
                if c in (0, 1):       # x / y center
                    tab.append([0.0, 2.0 * self.stride, -0.5 * self.stride,
                                self.stride, 1.0 if c == 1 else 0.0,
                                0.0, 0.0, 0.0])
                elif c in (2, 3):     # w / h
                    tab.append([4.0 * anchors_py[a][c - 2], 0.0, 0.0, 0.0, 0.0,
                                0.0, 0.0, 0.0])
                else:                 # obj / cls
                    tab.append([0.0, 1.0, 0.0, 0.0, 0.0, 0.0, 0.0, 0.0])
        self.dec_tab = jnp.array(tab, jnp.float32)   # (na*no, 8)

    def forward(self, im_nchw):
        # forward(im): b, ch, h, w = im.shape ; pt path -> model(im)
        B, C, H, W = im_nchw.shape
        assert C == 3 and H % 4 == 0 and W % 4 == 0, \
            "input spatial dims must be divisible by the total stride (4)"
        if self.fp16:
            im_nchw = im_nchw.astype(jnp.float16)
        na, no = self.na, self.no

        # stage 1: parity repack (single pass) + fused-tap conv1 kernel
        p1, hp2, wp2 = _parity_planes(im_nchw)
        y1, h1 = conv3x3_s2_silu(p1, self.w1_taps, self.b1_col, hp2, wp2)
        w1_ = wp2 - 1                                    # real output width
        y1 = y1.reshape(B, 16, h1, wp2)[:, :, :, :w1_]   # drop garbage column

        # stage 2: repack + fused conv2 + 1x1 head + Detect decode kernel
        p2, hq2, wq2 = _parity_planes(y1)
        z, ny = conv3x3_s2_head_decode(p2, self.w2_taps, self.b2_col,
                                       self.wh_mat, self.bh_col, self.dec_tab,
                                       hq2, wq2)
        nx = wq2 - 1
        # (B, na*no, ny*(nx+1)) -> drop garbage column, match YOLOv5 ordering
        z = z.reshape(B, na, no, ny, nx + 1)[:, :, :, :, :nx]
        z = jnp.transpose(z, (0, 1, 3, 4, 2))            # (B, na, ny, nx, no)
        return z.reshape(B, na * ny * nx, no)

    __call__ = forward


def _reference_forward(model, im_nchw):
    """Pure-JAX f32 reference of the same forward, for numerical validation."""
    x = jnp.transpose(im_nchw, (0, 2, 3, 1))

    def conv(x, w_oihw, b, stride, pad, act):
        w = jnp.transpose(w_oihw, (2, 3, 1, 0))           # HWIO
        y = lax.conv_general_dilated(
            x, w, (stride, stride), ((pad, pad), (pad, pad)),
            dimension_numbers=("NHWC", "HWIO", "NHWC"))
        y = y + b
        return y * jax.nn.sigmoid(y) if act else y

    x = conv(x, model.w1, model.b1, 2, 1, True)
    x = conv(x, model.w2, model.b2, 2, 1, True)
    p = conv(x, model.wh, model.bh, 1, 0, False)          # (B, ny, nx, na*no)
    B, ny, nx, _ = p.shape
    na, no = model.na, model.no
    s = jax.nn.sigmoid(p.reshape(B, ny, nx, na, no))
    gy, gx = jnp.meshgrid(jnp.arange(ny, dtype=jnp.float32),
                          jnp.arange(nx, dtype=jnp.float32), indexing="ij")
    gx = gx[None, :, :, None]
    gy = gy[None, :, :, None]
    xy = jnp.stack([(s[..., 0] * 2.0 - 0.5 + gx) * model.stride,
                    (s[..., 1] * 2.0 - 0.5 + gy) * model.stride], axis=-1)
    wh = (s[..., 2:4] * 2.0) ** 2 * model.anchor_grid[None, None, None]
    z = jnp.concatenate([xy, wh, s[..., 4:]], axis=-1)
    z = jnp.transpose(z, (0, 3, 1, 2, 4))
    return z.reshape(B, na * ny * nx, no)


# TODO(synk): non-pt backends (ONNX/TensorRT/TFLite/OpenVINO/... external
# runtimes), .pt checkpoint loading, warmup() and from_numpy() are host-side
# runtime dispatch with no Pallas equivalent.

if __name__ == "__main__":
    key = jax.random.PRNGKey(0)
    k_model, k_input = jax.random.split(key)
    model = DetectMultiBackendPallas(k_model, nc=2, na=3)

    # small input consistent with forward(): (b, ch, h, w) NCHW float32
    im = jax.random.normal(k_input, (2, 3, 16, 16), jnp.float32)

    y = jax.block_until_ready(model(im))
    assert y.shape == (2, 3 * 4 * 4, 7), y.shape
    assert bool(jnp.all(jnp.isfinite(y)))

    # numerical sanity check vs. pure-JAX f32 reference (bf16 kernel path ->
    # loose tolerance)
    ref = jax.block_until_ready(_reference_forward(model, im))
    max_err = float(jnp.max(jnp.abs(y - ref)))
    assert max_err < 0.25, f"max abs err vs reference: {max_err}"
    print("KERNEL_OK")
</pallas_src>

<mosaic_0001>
module attributes {stable_mosaic.version = 11 : i64} {
  func.func @_conv3x3s2_silu_kernel(%arg0: i32, %arg1: memref<1x4x8x89xbf16, #tpu.memory_space<vmem>>, %arg2: memref<9x16x8xbf16, #tpu.memory_space<vmem>>, %arg3: memref<16x1xf32, #tpu.memory_space<vmem>>, %arg4: memref<1x16x72xbf16, #tpu.memory_space<vmem>>, %arg5: memref<16x72xf32, #tpu.memory_space<vmem>>) attributes {dimension_semantics = [#tpu.dimension_semantics<parallel>], iteration_bounds = array<i64: 2>, scalar_prefetch = 0 : i64, scratch_operands = 1 : i64, tpu.core_type = #tpu.core_type<tc>, window_params = [{transform_indices = @transform_0, window_bounds = array<i64: 1, 4, 8, 89>}, {pipeline_mode = #tpu.pipeline_mode<synchronous>, transform_indices = @transform_1, window_bounds = array<i64: 9, 16, 8>}, {pipeline_mode = #tpu.pipeline_mode<synchronous>, transform_indices = @transform_2, window_bounds = array<i64: 16, 1>}, {transform_indices = @transform_3, window_bounds = array<i64: 1, 16, 72>}]} {
    %c0 = arith.constant 0 : index
    %c0_0 = arith.constant 0 : index
    %c0_1 = arith.constant 0 : index
    %c0_2 = arith.constant 0 : index
    %0 = vector.load %arg1[%c0, %c0_0, %c0_1, %c0_2] : memref<1x4x8x89xbf16, #tpu.memory_space<vmem>>, vector<1x1x8x72xbf16>
    %1 = vector.shape_cast %0 : vector<1x1x8x72xbf16> to vector<8x72xbf16>
    %c0_3 = arith.constant 0 : index
    %c0_4 = arith.constant 0 : index
    %c0_5 = arith.constant 0 : index
    %2 = vector.load %arg2[%c0_3, %c0_4, %c0_5] : memref<9x16x8xbf16, #tpu.memory_space<vmem>>, vector<1x16x8xbf16>
    %3 = vector.shape_cast %2 : vector<1x16x8xbf16> to vector<16x8xbf16>
    %cst = arith.constant dense<0.000000e+00> : vector<16x72xf32>
    %4 = tpu.matmul %3, %1, %cst {dimension_numbers = #tpu.dot_dimension_numbers<[1], [0], [0], [1], [0, 0, 1, 1], [], []>} : vector<16x8xbf16>, vector<8x72xbf16>, vector<16x72xf32> -> vector<16x72xf32>
    %c0_6 = arith.constant 0 : index
    %c0_7 = arith.constant 0 : index
    %5 = vector.load %arg5[%c0_6, %c0_7] : memref<16x72xf32, #tpu.memory_space<vmem>>, vector<16x72xf32>
    tpu.vector_store %arg5[%c0_6, %c0_7], %4 {strides = array<i32>} : memref<16x72xf32, #tpu.memory_space<vmem>>, vector<16x72xf32>,
    %c0_8 = arith.constant 0 : index
    %c1 = arith.constant 1 : index
    %c0_9 = arith.constant 0 : index
    %c0_10 = arith.constant 0 : index
    %6 = vector.load %arg1[%c0_8, %c1, %c0_9, %c0_10] : memref<1x4x8x89xbf16, #tpu.memory_space<vmem>>, vector<1x1x8x72xbf16>
    %7 = vector.shape_cast %6 : vector<1x1x8x72xbf16> to vector<8x72xbf16>
    %c1_11 = arith.constant 1 : index
    %c0_12 = arith.constant 0 : index
    %c0_13 = arith.constant 0 : index
    %8 = vector.load %arg2[%c1_11, %c0_12, %c0_13] : memref<9x16x8xbf16, #tpu.memory_space<vmem>>, vector<1x16x8xbf16>
    %9 = vector.shape_cast %8 : vector<1x16x8xbf16> to vector<16x8xbf16>
    %cst_14 = arith.constant dense<0.000000e+00> : vector<16x72xf32>
    %10 = tpu.matmul %9, %7, %cst_14 {dimension_numbers = #tpu.dot_dimension_numbers<[1], [0], [0], [1], [0, 0, 1, 1], [], []>} : vector<16x8xbf16>, vector<8x72xbf16>, vector<16x72xf32> -> vector<16x72xf32>
    %c0_15 = arith.constant 0 : index
    %c0_16 = arith.constant 0 : index
    %11 = vector.load %arg5[%c0_15, %c0_16] : memref<16x72xf32, #tpu.memory_space<vmem>>, vector<16x72xf32>
    %12 = arith.addf %11, %10 : vector<16x72xf32>
    %c0_17 = arith.constant 0 : index
    %c0_18 = arith.constant 0 : index
    %13 = vector.load %arg5[%c0_17, %c0_18] : memref<16x72xf32, #tpu.memory_space<vmem>>, vector<16x72xf32>
    tpu.vector_store %arg5[%c0_17, %c0_18], %12 {strides = array<i32>} : memref<16x72xf32, #tpu.memory_space<vmem>>, vector<16x72xf32>,
    %c0_19 = arith.constant 0 : index
    %c0_20 = arith.constant 0 : index
    %c0_21 = arith.constant 0 : index
    %c1_22 = arith.constant 1 : index
    %14 = vector.load %arg1[%c0_19, %c0_20, %c0_21, %c1_22] : memref<1x4x8x89xbf16, #tpu.memory_space<vmem>>, vector<1x1x8x72xbf16>
    %15 = vector.shape_cast %14 : vector<1x1x8x72xbf16> to vector<8x72xbf16>
    %c2 = arith.constant 2 : index
    %c0_23 = arith.constant 0 : index
    %c0_24 = arith.constant 0 : index
    %16 = vector.load %arg2[%c2, %c0_23, %c0_24] : memref<9x16x8xbf16, #tpu.memory_space<vmem>>, vector<1x16x8xbf16>
    %17 = vector.shape_cast %16 : vector<1x16x8xbf16> to vector<16x8xbf16>
    %cst_25 = arith.constant dense<0.000000e+00> : vector<16x72xf32>
    %18 = tpu.matmul %17, %15, %cst_25 {dimension_numbers = #tpu.dot_dimension_numbers<[1], [0], [0], [1], [0, 0, 1, 1], [], []>} : vector<16x8xbf16>, vector<8x72xbf16>, vector<16x72xf32> -> vector<16x72xf32>
    %c0_26 = arith.constant 0 : index
    %c0_27 = arith.constant 0 : index
    %19 = vector.load %arg5[%c0_26, %c0_27] : memref<16x72xf32, #tpu.memory_space<vmem>>, vector<16x72xf32>
    %20 = arith.addf %19, %18 : vector<16x72xf32>
    %c0_28 = arith.constant 0 : index
    %c0_29 = arith.constant 0 : index
    %21 = vector.load %arg5[%c0_28, %c0_29] : memref<16x72xf32, #tpu.memory_space<vmem>>, vector<16x72xf32>
    tpu.vector_store %arg5[%c0_28, %c0_29], %20 {strides = array<i32>} : memref<16x72xf32, #tpu.memory_space<vmem>>, vector<16x72xf32>,
    %c0_30 = arith.constant 0 : index
    %c2_31 = arith.constant 2 : index
    %c0_32 = arith.constant 0 : index
    %c0_33 = arith.constant 0 : index
    %22 = vector.load %arg1[%c0_30, %c2_31, %c0_32, %c0_33] : memref<1x4x8x89xbf16, #tpu.memory_space<vmem>>, vector<1x1x8x72xbf16>
    %23 = vector.shape_cast %22 : vector<1x1x8x72xbf16> to vector<8x72xbf16>
    %c3 = arith.constant 3 : index
    %c0_34 = arith.constant 0 : index
    %c0_35 = arith.constant 0 : index
    %24 = vector.load %arg2[%c3, %c0_34, %c0_35] : memref<9x16x8xbf16, #tpu.memory_space<vmem>>, vector<1x16x8xbf16>
    %25 = vector.shape_cast %24 : vector<1x16x8xbf16> to vector<16x8xbf16>
    %cst_36 = arith.constant dense<0.000000e+00> : vector<16x72xf32>
    %26 = tpu.matmul %25, %23, %cst_36 {dimension_numbers = #tpu.dot_dimension_numbers<[1], [0], [0], [1], [0, 0, 1, 1], [], []>} : vector<16x8xbf16>, vector<8x72xbf16>, vector<16x72xf32> -> vector<16x72xf32>
    %c0_37 = arith.constant 0 : index
    %c0_38 = arith.constant 0 : index
    %27 = vector.load %arg5[%c0_37, %c0_38] : memref<16x72xf32, #tpu.memory_space<vmem>>, vector<16x72xf32>
    %28 = arith.addf %27, %26 : vector<16x72xf32>
    %c0_39 = arith.constant 0 : index
    %c0_40 = arith.constant 0 : index
    %29 = vector.load %arg5[%c0_39, %c0_40] : memref<16x72xf32, #tpu.memory_space<vmem>>, vector<16x72xf32>
    tpu.vector_store %arg5[%c0_39, %c0_40], %28 {strides = array<i32>} : memref<16x72xf32, #tpu.memory_space<vmem>>, vector<16x72xf32>,
    %c0_41 = arith.constant 0 : index
    %c3_42 = arith.constant 3 : index
    %c0_43 = arith.constant 0 : index
    %c0_44 = arith.constant 0 : index
    %30 = vector.load %arg1[%c0_41, %c3_42, %c0_43, %c0_44] : memref<1x4x8x89xbf16, #tpu.memory_space<vmem>>, vector<1x1x8x72xbf16>
    %31 = vector.shape_cast %30 : vector<1x1x8x72xbf16> to vector<8x72xbf16>
    %c4 = arith.constant 4 : index
    %c0_45 = arith.constant 0 : index
    %c0_46 = arith.constant 0 : index
    %32 = vector.load %arg2[%c4, %c0_45, %c0_46] : memref<9x16x8xbf16, #tpu.memory_space<vmem>>, vector<1x16x8xbf16>
    %33 = vector.shape_cast %32 : vector<1x16x8xbf16> to vector<16x8xbf16>
    %cst_47 = arith.constant dense<0.000000e+00> : vector<16x72xf32>
    %34 = tpu.matmul %33, %31, %cst_47 {dimension_numbers = #tpu.dot_dimension_numbers<[1], [0], [0], [1], [0, 0, 1, 1], [], []>} : vector<16x8xbf16>, vector<8x72xbf16>, vector<16x72xf32> -> vector<16x72xf32>
    %c0_48 = arith.constant 0 : index
    %c0_49 = arith.constant 0 : index
    %35 = vector.load %arg5[%c0_48, %c0_49] : memref<16x72xf32, #tpu.memory_space<vmem>>, vector<16x72xf32>
    %36 = arith.addf %35, %34 : vector<16x72xf32>
    %c0_50 = arith.constant 0 : index
    %c0_51 = arith.constant 0 : index
    %37 = vector.load %arg5[%c0_50, %c0_51] : memref<16x72xf32, #tpu.memory_space<vmem>>, vector<16x72xf32>
    tpu.vector_store %arg5[%c0_50, %c0_51], %36 {strides = array<i32>} : memref<16x72xf32, #tpu.memory_space<vmem>>, vector<16x72xf32>,
    %c0_52 = arith.constant 0 : index
    %c2_53 = arith.constant 2 : index
    %c0_54 = arith.constant 0 : index
    %c1_55 = arith.constant 1 : index
    %38 = vector.load %arg1[%c0_52, %c2_53, %c0_54, %c1_55] : memref<1x4x8x89xbf16, #tpu.memory_space<vmem>>, vector<1x1x8x72xbf16>
    %39 = vector.shape_cast %38 : vector<1x1x8x72xbf16> to vector<8x72xbf16>
    %c5 = arith.constant 5 : index
    %c0_56 = arith.constant 0 : index
    %c0_57 = arith.constant 0 : index
    %40 = vector.load %arg2[%c5, %c0_56, %c0_57] : memref<9x16x8xbf16, #tpu.memory_space<vmem>>, vector<1x16x8xbf16>
    %41 = vector.shape_cast %40 : vector<1x16x8xbf16> to vector<16x8xbf16>
    %cst_58 = arith.constant dense<0.000000e+00> : vector<16x72xf32>
    %42 = tpu.matmul %41, %39, %cst_58 {dimension_numbers = #tpu.dot_dimension_numbers<[1], [0], [0], [1], [0, 0, 1, 1], [], []>} : vector<16x8xbf16>, vector<8x72xbf16>, vector<16x72xf32> -> vector<16x72xf32>
    %c0_59 = arith.constant 0 : index
    %c0_60 = arith.constant 0 : index
    %43 = vector.load %arg5[%c0_59, %c0_60] : memref<16x72xf32, #tpu.memory_space<vmem>>, vector<16x72xf32>
    %44 = arith.addf %43, %42 : vector<16x72xf32>
    %c0_61 = arith.constant 0 : index
    %c0_62 = arith.constant 0 : index
    %45 = vector.load %arg5[%c0_61, %c0_62] : memref<16x72xf32, #tpu.memory_space<vmem>>, vector<16x72xf32>
    tpu.vector_store %arg5[%c0_61, %c0_62], %44 {strides = array<i32>} : memref<16x72xf32, #tpu.memory_space<vmem>>, vector<16x72xf32>,
    %c0_63 = arith.constant 0 : index
    %c0_64 = arith.constant 0 : index
    %c0_65 = arith.constant 0 : index
    %c9 = arith.constant 9 : index
    %46 = vector.load %arg1[%c0_63, %c0_64, %c0_65, %c9] : memref<1x4x8x89xbf16, #tpu.memory_space<vmem>>, vector<1x1x8x72xbf16>
    %47 = vector.shape_cast %46 : vector<1x1x8x72xbf16> to vector<8x72xbf16>
    %c6 = arith.constant 6 : index
    %c0_66 = arith.constant 0 : index
    %c0_67 = arith.constant 0 : index
    %48 = vector.load %arg2[%c6, %c0_66, %c0_67] : memref<9x16x8xbf16, #tpu.memory_space<vmem>>, vector<1x16x8xbf16>
    %49 = vector.shape_cast %48 : vector<1x16x8xbf16> to vector<16x8xbf16>
    %cst_68 = arith.constant dense<0.000000e+00> : vector<16x72xf32>
    %50 = tpu.matmul %49, %47, %cst_68 {dimension_numbers = #tpu.dot_dimension_numbers<[1], [0], [0], [1], [0, 0, 1, 1], [], []>} : vector<16x8xbf16>, vector<8x72xbf16>, vector<16x72xf32> -> vector<16x72xf32>
    %c0_69 = arith.constant 0 : index
    %c0_70 = arith.constant 0 : index
    %51 = vector.load %arg5[%c0_69, %c0_70] : memref<16x72xf32, #tpu.memory_space<vmem>>, vector<16x72xf32>
    %52 = arith.addf %51, %50 : vector<16x72xf32>
    %c0_71 = arith.constant 0 : index
    %c0_72 = arith.constant 0 : index
    %53 = vector.load %arg5[%c0_71, %c0_72] : memref<16x72xf32, #tpu.memory_space<vmem>>, vector<16x72xf32>
    tpu.vector_store %arg5[%c0_71, %c0_72], %52 {strides = array<i32>} : memref<16x72xf32, #tpu.memory_space<vmem>>, vector<16x72xf32>,
    %c0_73 = arith.constant 0 : index
    %c1_74 = arith.constant 1 : index
    %c0_75 = arith.constant 0 : index
    %c9_76 = arith.constant 9 : index
    %54 = vector.load %arg1[%c0_73, %c1_74, %c0_75, %c9_76] : memref<1x4x8x89xbf16, #tpu.memory_space<vmem>>, vector<1x1x8x72xbf16>
    %55 = vector.shape_cast %54 : vector<1x1x8x72xbf16> to vector<8x72xbf16>
    %c7 = arith.constant 7 : index
    %c0_77 = arith.constant 0 : index
    %c0_78 = arith.constant 0 : index
    %56 = vector.load %arg2[%c7, %c0_77, %c0_78] : memref<9x16x8xbf16, #tpu.memory_space<vmem>>, vector<1x16x8xbf16>
    %57 = vector.shape_cast %56 : vector<1x16x8xbf16> to vector<16x8xbf16>
    %cst_79 = arith.constant dense<0.000000e+00> : vector<16x72xf32>
    %58 = tpu.matmul %57, %55, %cst_79 {dimension_numbers = #tpu.dot_dimension_numbers<[1], [0], [0], [1], [0, 0, 1, 1], [], []>} : vector<16x8xbf16>, vector<8x72xbf16>, vector<16x72xf32> -> vector<16x72xf32>
    %c0_80 = arith.constant 0 : index
    %c0_81 = arith.constant 0 : index
    %59 = vector.load %arg5[%c0_80, %c0_81] : memref<16x72xf32, #tpu.memory_space<vmem>>, vector<16x72xf32>
    %60 = arith.addf %59, %58 : vector<16x72xf32>
    %c0_82 = arith.constant 0 : index
    %c0_83 = arith.constant 0 : index
    %61 = vector.load %arg5[%c0_82, %c0_83] : memref<16x72xf32, #tpu.memory_space<vmem>>, vector<16x72xf32>
    tpu.vector_store %arg5[%c0_82, %c0_83], %60 {strides = array<i32>} : memref<16x72xf32, #tpu.memory_space<vmem>>, vector<16x72xf32>,
    %c0_84 = arith.constant 0 : index
    %c0_85 = arith.constant 0 : index
    %c0_86 = arith.constant 0 : index
    %c10 = arith.constant 10 : index
    %62 = vector.load %arg1[%c0_84, %c0_85, %c0_86, %c10] : memref<1x4x8x89xbf16, #tpu.memory_space<vmem>>, vector<1x1x8x72xbf16>
    %63 = vector.shape_cast %62 : vector<1x1x8x72xbf16> to vector<8x72xbf16>
    %c8 = arith.constant 8 : index
    %c0_87 = arith.constant 0 : index
    %c0_88 = arith.constant 0 : index
    %64 = vector.load %arg2[%c8, %c0_87, %c0_88] : memref<9x16x8xbf16, #tpu.memory_space<vmem>>, vector<1x16x8xbf16>
    %65 = vector.shape_cast %64 : vector<1x16x8xbf16> to vector<16x8xbf16>
    %cst_89 = arith.constant dense<0.000000e+00> : vector<16x72xf32>
    %66 = tpu.matmul %65, %63, %cst_89 {dimension_numbers = #tpu.dot_dimension_numbers<[1], [0], [0], [1], [0, 0, 1, 1], [], []>} : vector<16x8xbf16>, vector<8x72xbf16>, vector<16x72xf32> -> vector<16x72xf32>
    %c0_90 = arith.constant 0 : index
    %c0_91 = arith.constant 0 : index
    %67 = vector.load %arg5[%c0_90, %c0_91] : memref<16x72xf32, #tpu.memory_space<vmem>>, vector<16x72xf32>
    %68 = arith.addf %67, %66 : vector<16x72xf32>
    %c0_92 = arith.constant 0 : index
    %c0_93 = arith.constant 0 : index
    %69 = vector.load %arg5[%c0_92, %c0_93] : memref<16x72xf32, #tpu.memory_space<vmem>>, vector<16x72xf32>
    tpu.vector_store %arg5[%c0_92, %c0_93], %68 {strides = array<i32>} : memref<16x72xf32, #tpu.memory_space<vmem>>, vector<16x72xf32>,
    %c0_94 = arith.constant 0 : index
    %c0_95 = arith.constant 0 : index
    %70 = vector.load %arg5[%c0_94, %c0_95] : memref<16x72xf32, #tpu.memory_space<vmem>>, vector<16x72xf32>
    %c0_96 = arith.constant 0 : index
    %c0_97 = arith.constant 0 : index
    %71 = vector.load %arg3[%c0_96, %c0_97] : memref<16x1xf32, #tpu.memory_space<vmem>>, vector<16x1xf32>
    %72 = vector.broadcast %71 : vector<16x1xf32> to vector<16x72xf32>
    %73 = arith.addf %70, %72 : vector<16x72xf32>
    %74 = arith.negf %73 : vector<16x72xf32>
    %75 = math.exp %74 : vector<16x72xf32>
    %cst_98 = arith.constant 1.000000e+00 : f32
    %76 = vector.broadcast %cst_98 : f32 to vector<16x72xf32>
    %77 = arith.addf %76, %75 : vector<16x72xf32>
    %78 = arith.divf %76, %77 : vector<16x72xf32>
    %79 = arith.mulf %73, %78 : vector<16x72xf32>
    %80 = arith.truncf %79 : vector<16x72xf32> to vector<16x72xbf16>
    %c0_99 = arith.constant 0 : index
    %c0_100 = arith.constant 0 : index
    %c0_101 = arith.constant 0 : index
    %81 = vector.load %arg4[%c0_99, %c0_100, %c0_101] : memref<1x16x72xbf16, #tpu.memory_space<vmem>>, vector<1x16x72xbf16>
    %82 = vector.shape_cast %81 : vector<1x16x72xbf16> to vector<16x72xbf16>
    %83 = vector.shape_cast %80 : vector<16x72xbf16> to vector<1x16x72xbf16>
    tpu.vector_store %arg4[%c0_99, %c0_100, %c0_101], %83 {strides = array<i32>} : memref<1x16x72xbf16, #tpu.memory_space<vmem>>, vector<1x16x72xbf16>,
    return
  }
  func.func @transform_0(%arg0: i32) -> (i32, i32, i32, i32) {
    %c0_i32 = arith.constant 0 : i32
    %c0_i32_0 = arith.constant 0 : i32
    %c0_i32_1 = arith.constant 0 : i32
    %c0_i32_2 = arith.constant 0 : i32
    return %arg0, %c0_i32, %c0_i32_0, %c0_i32_1 : i32, i32, i32, i32
  }
  func.func @transform_1(%arg0: i32) -> (i32, i32, i32) {
    %c0_i32 = arith.constant 0 : i32
    %c0_i32_0 = arith.constant 0 : i32
    %c0_i32_1 = arith.constant 0 : i32
    %c0_i32_2 = arith.constant 0 : i32
    return %c0_i32, %c0_i32_0, %c0_i32_1 : i32, i32, i32
  }
  func.func @transform_2(%arg0: i32) -> (i32, i32) {
    %c0_i32 = arith.constant 0 : i32
    %c0_i32_0 = arith.constant 0 : i32
    %c0_i32_1 = arith.constant 0 : i32
    return %c0_i32, %c0_i32_0 : i32, i32
  }
  func.func @transform_3(%arg0: i32) -> (i32, i32, i32) {
    %c0_i32 = arith.constant 0 : i32
    %c0_i32_0 = arith.constant 0 : i32
    %c0_i32_1 = arith.constant 0 : i32
    return %arg0, %c0_i32, %c0_i32_0 : i32, i32, i32
  }
}

</mosaic_0001>

<llo_original>
// kernel: tpu_custom_call.1
$region0: #{tpu_custom_call.1}
  #allocation0 [shape = 'u32[]', space=smem, size = 0x4, offset = 0x4, fixed_abs, tag = 'smem constant byte address 0x4 - core index']
  #allocation1 [shape = 'u32[144,128]{1,0:T(1,128)}', space=vmem, size = 0x12000, scoped, tag = 'internal scratch']
  #allocation2 [shape = 'f32[16,72]{1,0:T(8,128)}', space=vmem, size = 0x2000, scoped, tag = 'scratch operand']
  %s0 = inlined_call_operand.vmem [shape: bf16[2,4,8,89], index: 0, kind: input, shape index: {}]
  %s1 = inlined_call_operand.vmem [shape: bf16[9,16,8], index: 1, kind: input, shape index: {}]
  %s2 = inlined_call_operand.vmem [shape: f32[16,1], index: 2, kind: input, shape index: {}]
  %s3 = inlined_call_operand.hbm [shape: bf16[2,16,72], index: 3, kind: output, shape index: {}]
  %s4 = sld [smem:[#allocation0]]
  $region45: #{tpu_custom_call.1} parent=0
    _
  %s6 = ssub.s32 1, %s4
  %s7 = scalar_select 0, %s6, %s4
  $region1: #{tpu_custom_call.1} parent=0
    #allocation3 [shape = 'u8[8192]{0}', space=vmem, size = 0x2000, scoped, tag = 'output window, operand 0']
    #allocation4 [shape = 's32[2]{0}', space=sflag, size = 0x8, scoped, tag = 'scoped memory for tpu_custom_call.1']
    %8 = vsyncpa [#allocation4], 0
    %s9 = scalar_lea.sflag [#allocation4], 1
    %10 = vsyncpa %s9, 0
    loop: start=0, step=1, limit=4
    $region2: #{tpu_custom_call.1} parent=1 // loop_pre_header
      _
    $region3: #{tpu_custom_call.1} parent=1 // loop_header
      %s12 = sphi 0, %s16
      %p13 = scmp.ge.s32.totalorder %s12, 4
      %s22 = sphi 0, %s24
      %s25 = sphi 0, %s22
      %s26 = sphi 0, %s25
      %s42 = sphi 0, %s26
      %s46 = sphi 0, %s46
      %s48 = sphi 0, %s46
      %s49 = sphi 0, %s48
      %s63 = sphi 0, %s49
      %s67 = sphi 0, %s67
      %s69 = sphi 0, %s67
      %s70 = sphi 0, %s69
      %s84 = sphi 0, %s70
      %s90 = sphi 0, %s92
      %s93 = sphi 0, %s90
      %s94 = sphi 0, %s93
      %s110 = sphi 0, %s94
    $region4: #{tpu_custom_call.1} parent=1 // loop_header_branch
      %15 = sbr.rel (%p13) target = $region8
    $region5: #{tpu_custom_call.1} parent=1 // loop_body
      %s17 = ssub.s32 %s12, 1
      %s18 = ssub.s32 %s12, 2
      %s19 = sadd.s32 %s12, 1
      %s20 = ssub.s32 %s12, %s19
      %p21 = scmp.eq.s32.totalorder %s20, 0
      %s23 = sadd.s32 %s22, 1
      %s24 = scalar_select %p21, %s22, %s23
      %p27 = pneg %p21
      %p28 = scmp.eq.s32.totalorder %s12, 1
      %p29 = por %p27, %p28
      %p30 = scmp.ne.s32.totalorder %s22, %s25
      %p31 = scmp.eq.s32.totalorder %s12, 0
      %p32 = por %p30, %p31
      %p33 = scmp.ne.s32.totalorder %s22, %s25
      %p34 = scmp.eq.s32.totalorder %s17, 1
      %p35 = por %p33, %p34
      %p36 = scmp.ne.s32.totalorder %s25, %s26
      %p37 = scmp.eq.s32.totalorder %s17, 0
      %p38 = por %p36, %p37
      %p39 = scmp.ne.s32.totalorder %s25, %s26
      %p40 = scmp.eq.s32.totalorder %s18, 1
      %p41 = por %p39, %p40
      %p43 = scmp.ne.s32.totalorder %s26, %s42
      %p44 = scmp.eq.s32.totalorder %s18, 0
      %p45 = por %p43, %p44
      %s47 = sadd.s32 %s46, 1
      %p50 = scmp.eq.s32.totalorder %s12, 1
      %p51 = scmp.ne.s32.totalorder %s46, %s48
      %p52 = scmp.eq.s32.totalorder %s12, 0
      %p53 = por %p51, %p52
      %p54 = scmp.ne.s32.totalorder %s46, %s48
      %p55 = scmp.eq.s32.totalorder %s17, 1
      %p56 = por %p54, %p55
      %p57 = scmp.ne.s32.totalorder %s48, %s49
      %p58 = scmp.eq.s32.totalorder %s17, 0
      %p59 = por %p57, %p58
      %p60 = scmp.ne.s32.totalorder %s48, %s49
      %p61 = scmp.eq.s32.totalorder %s18, 1
      %p62 = por %p60, %p61
      %p64 = scmp.ne.s32.totalorder %s49, %s63
      %p65 = scmp.eq.s32.totalorder %s18, 0
      %p66 = por %p64, %p65
      %s68 = sadd.s32 %s67, 1
      %p71 = scmp.eq.s32.totalorder %s12, 1
      %p72 = scmp.ne.s32.totalorder %s67, %s69
      %p73 = scmp.eq.s32.totalorder %s12, 0
      %p74 = por %p72, %p73
      %p75 = scmp.ne.s32.totalorder %s67, %s69
      %p76 = scmp.eq.s32.totalorder %s17, 1
      %p77 = por %p75, %p76
      %p78 = scmp.ne.s32.totalorder %s69, %s70
      %p79 = scmp.eq.s32.totalorder %s17, 0
      %p80 = por %p78, %p79
      %p81 = scmp.ne.s32.totalorder %s69, %s70
      %p82 = scmp.eq.s32.totalorder %s18, 1
      %p83 = por %p81, %p82
      %p85 = scmp.ne.s32.totalorder %s70, %s84
      %p86 = scmp.eq.s32.totalorder %s18, 0
      %p87 = por %p85, %p86
      %s88 = ssub.s32 %s12, %s19
      %p89 = scmp.eq.s32.totalorder %s88, 0
      %s91 = sadd.s32 %s90, 1
      %s92 = scalar_select %p89, %s90, %s91
      %p95 = pneg %p89
      %p96 = scmp.eq.s32.totalorder %s12, 1
      %p97 = por %p95, %p96
      %p98 = scmp.ne.s32.totalorder %s90, %s93
      %p99 = scmp.eq.s32.totalorder %s12, 0
      %p100 = por %p98, %p99
      %p101 = scmp.ne.s32.totalorder %s90, %s93
      %p102 = scmp.eq.s32.totalorder %s17, 1
      %p103 = por %p101, %p102
      %p104 = scmp.ne.s32.totalorder %s93, %s94
      %p105 = scmp.eq.s32.totalorder %s17, 0
      %p106 = por %p104, %p105
      %p107 = scmp.ne.s32.totalorder %s93, %s94
      %p108 = scmp.eq.s32.totalorder %s18, 1
      %p109 = por %p107, %p108
      %p111 = scmp.ne.s32.totalorder %s94, %s110
      %p112 = scmp.eq.s32.totalorder %s18, 0
      %p113 = por %p111, %p112
      %p114 = scmp.le.s32.totalorder 1, %s12
      %p115 = scmp.lt.s32.totalorder %s12, 3
      %p116 = pnand %p114, %p115
      %p117 = pneg %p116
      // Predicated region
      $region9: #{tpu_custom_call.1} parent=5 // pred_check
        _
      $region10: #{tpu_custom_call.1} parent=5 // pred_check_branch
        %119 = sbr.rel (%p116) target = $region12
      $region11: #{tpu_custom_call.1} parent=5 // pred_region
        %s120 = ssub.s32 %s12, 1
        // Predicated region
        $region13: #{tpu_custom_call.1} parent=11 // pred_check
          %p121 = pneg %p59
        $region14: #{tpu_custom_call.1} parent=11 // pred_check_branch
          %123 = sbr.rel (%p121) target = $region16
        $region15: #{tpu_custom_call.1} parent=11 // pred_region
          _
        $region16: #{tpu_custom_call.1} parent=11 // pred_fallthru
          _
        // Predicated region
        $region17: #{tpu_custom_call.1} parent=11 // pred_check
          %p124 = pneg %p80
        $region18: #{tpu_custom_call.1} parent=11 // pred_check_branch
          %126 = sbr.rel (%p124) target = $region20
        $region19: #{tpu_custom_call.1} parent=11 // pred_region
          _
        $region20: #{tpu_custom_call.1} parent=11 // pred_fallthru
          _
      $region12: #{tpu_custom_call.1} parent=5 // pred_fallthru
        _
      %p127 = scmp.lt.s32.totalorder %s12, 2
      // Predicated region
      $region21: #{tpu_custom_call.1} parent=5 // pred_check
        %p128 = pneg %p127
      $region22: #{tpu_custom_call.1} parent=5 // pred_check_branch
        %130 = sbr.rel (%p128) target = $region24
      $region23: #{tpu_custom_call.1} parent=5 // pred_region
        // Predicated region
        $region25: #{tpu_custom_call.1} parent=23 // pred_check
          %p131 = pneg %p32
        $region26: #{tpu_custom_call.1} parent=23 // pred_check_branch
          %133 = sbr.rel (%p131) target = $region28
        $region27: #{tpu_custom_call.1} parent=23 // pred_region
          %p134 = scmp.lt.s32.totalorder %s12, 1
          %s135 = scalar_select %p134, %s12, 1
          %s136 = smul.addr %s135, 4
          %s137 = smul.addr %s136, 4
          %s138 = scalar_lea.vmem %s0, %s137
        $region28: #{tpu_custom_call.1} parent=23 // pred_fallthru
          _
      $region24: #{tpu_custom_call.1} parent=5 // pred_fallthru
        _
      %p139 = scmp.le.s32.totalorder 1, %s12
      %p140 = scmp.lt.s32.totalorder %s12, 3
      %p141 = pnand %p139, %p140
      %p142 = pneg %p141
      // Predicated region
      $region29: #{tpu_custom_call.1} parent=5 // pred_check
        _
      $region30: #{tpu_custom_call.1} parent=5 // pred_check_branch
        %144 = sbr.rel (%p141) target = $region32
      $region31: #{tpu_custom_call.1} parent=5 // pred_region
        %s145 = ssub.s32 %s12, 1
        %p146 = scmp.lt.s32.totalorder %s17, 1
        %s147 = scalar_select %p146, %s17, 1
        %s148 = smul.addr %s147, 4
        %s149 = smul.addr %s148, 4
        %s150 = scalar_lea.vmem %s0, %s149
        %p151 = pneg %p38
        %p152 = pneg %p35
        %p153 = pneg %p59
        %p154 = pneg %p56
        %p155 = pneg %p80
        %p156 = pneg %p77
        %p157 = pneg %p106
        %p158 = pneg %p103
        %s159 = sand.u32 %s93, 1
        %s160 = scalar_lea.sflag [#allocation4], %s159
        %s161 = sand.u32 %s93, 1
        %s162 = smul.addr %s161, 8
        %s163 = scalar_lea.vmem [#allocation3], %s162
        %p164 = scmp.lt.s32.totalorder %s17, 1
        %s165 = scalar_select %p164, %s17, 1
        %s166 = smul.addr %s165, 4
        %s167 = smul.addr %s166, 4
        %s168 = scalar_lea.vmem %s0, %s167
        %v170 = vld [vmem:[%s168] sm:$0xf]
        %v171 = vld [vmem:[%s1] sm:$0xf]
        %v172 = vld [vmem:[%s1 + $0x4] sm:$0xf]
        %v175 = vunpack.c.l.b16 %v171
        %v176 = vunpack.c.l.b16 %v172
        %v177 = vpack.c.b16 %v176, %v175
        %vm178 = vcmask 64512
        %v180 = vsel %vm178, %v177, 0
        %vm182 = vcmask 1043456
        %v184 = vsel %vm182, %v170, 0
        %186 = vmatprep.subr.bf16.mxu0 0
        %187 = vmatpush1.bf16.msra.mxu0 %v184
        %188 = vmatprep.subr.bf16.mxu0 0
        %189 = vmatpush1.bf16.msra.mxu0 0
        %190 = vmatprep.subr.bf16.mxu0 0
        %191 = vmatpush1.bf16.msra.mxu0 0
        %192 = vmatprep.subr.bf16.mxu0 0
        %193 = vmatpush1.bf16.msra.mxu0 0
        %194 = vmatprep.subr.bf16.mxu0 0
        %195 = vmatpush1.bf16.msra.mxu0 0
        %196 = vmatprep.subr.bf16.mxu0 0
        %197 = vmatpush1.bf16.msra.mxu0 0
        %198 = vmatprep.subr.bf16.mxu0 0
        %199 = vmatpush1.bf16.msra.mxu0 0
        %200 = vmatprep.subr.bf16.mxu0 0
        %201 = vmatpush1.bf16.msra.mxu0 0
        %202 = vmatprep.subr.bf16.mxu0 0
        %203 = vmatpush1.bf16.msra.mxu0 0
        %204 = vmatprep.subr.bf16.mxu0 0
        %205 = vmatpush1.bf16.msra.mxu0 0
        %206 = vmatprep.subr.bf16.mxu0 0
        %207 = vmatpush1.bf16.msra.mxu0 0
        %208 = vmatprep.subr.bf16.mxu0 0
        %209 = vmatpush1.bf16.msra.mxu0 0
        %210 = vmatprep.subr.bf16.mxu0 0
        %211 = vmatpush1.bf16.msra.mxu0 0
        %212 = vmatprep.subr.bf16.mxu0 0
        %213 = vmatpush1.bf16.msra.mxu0 0
        %214 = vmatprep.subr.bf16.mxu0 0
        %215 = vmatpush1.bf16.msra.mxu0 0
        %216 = vmatprep.subr.bf16.mxu0 0
        %217 = vmatpush1.bf16.msra.mxu0 0
        %218 = vmatprep.mubr.bf16.mxu0 0
        %219 = vmatmul.mubr.bf16.gmra.mrb[0].mxu0 %v180
        %v220 = vpop.f32.mrb[0].mxu0
        %v221 = vadd.f32 0.0, %v220
        %v222 = vpop.f32.mrb[0].mxu0
        %v223 = vpop.f32.mrb[0].mxu0
        %v224 = vadd.f32 0.0, %v223
        %v225 = vpop.f32.mrb[0].mxu0
        %226 = vdwg.mxu0
        %vm227 = vcmask 588800
        %228 = vst.msk [vmem:[#allocation2] sm:$0xff] %vm227, %v221
        %229 = vst.msk [vmem:[#allocation2 + $0x8] sm:$0xff] %vm227, %v224
        %s230 = scalar_lea.vmem %s168, 4
        %v231 = vld [vmem:[%s230] sm:$0xf]
        %s232 = scalar_lea.vmem %s1, 8
        %v233 = vld [vmem:[%s232] sm:$0xf]
        %v234 = vld [vmem:[%s232 + $0x4] sm:$0xf]
        %v237 = vunpack.c.l.b16 %v233
        %v238 = vunpack.c.l.b16 %v234
        %v239 = vpack.c.b16 %v238, %v237
        %v241 = vsel %vm178, %v239, 0
        %v244 = vsel %vm182, %v231, 0
        %246 = vmatprep.subr.bf16.mxu0 0
        %247 = vmatpush1.bf16.msra.mxu0 %v244
        %248 = vmatprep.subr.bf16.mxu0 0
        %249 = vmatpush1.bf16.msra.mxu0 0
        %250 = vmatprep.subr.bf16.mxu0 0
        %251 = vmatpush1.bf16.msra.mxu0 0
        %252 = vmatprep.subr.bf16.mxu0 0
        %253 = vmatpush1.bf16.msra.mxu0 0
        %254 = vmatprep.subr.bf16.mxu0 0
        %255 = vmatpush1.bf16.msra.mxu0 0
        %256 = vmatprep.subr.bf16.mxu0 0
        %257 = vmatpush1.bf16.msra.mxu0 0
        %258 = vmatprep.subr.bf16.mxu0 0
        %259 = vmatpush1.bf16.msra.mxu0 0
        %260 = vmatprep.subr.bf16.mxu0 0
        %261 = vmatpush1.bf16.msra.mxu0 0
        %262 = vmatprep.subr.bf16.mxu0 0
        %263 = vmatpush1.bf16.msra.mxu0 0
        %264 = vmatprep.subr.bf16.mxu0 0
        %265 = vmatpush1.bf16.msra.mxu0 0
        %266 = vmatprep.subr.bf16.mxu0 0
        %267 = vmatpush1.bf16.msra.mxu0 0
        %268 = vmatprep.subr.bf16.mxu0 0
        %269 = vmatpush1.bf16.msra.mxu0 0
        %270 = vmatprep.subr.bf16.mxu0 0
        %271 = vmatpush1.bf16.msra.mxu0 0
        %272 = vmatprep.subr.bf16.mxu0 0
        %273 = vmatpush1.bf16.msra.mxu0 0
        %274 = vmatprep.subr.bf16.mxu0 0
        %275 = vmatpush1.bf16.msra.mxu0 0
        %276 = vmatprep.subr.bf16.mxu0 0
        %277 = vmatpush1.bf16.msra.mxu0 0
        %278 = vmatprep.mubr.bf16.mxu0 0
        %279 = vmatmul.mubr.bf16.gmra.mrb[0].mxu0 %v241
        %v280 = vpop.f32.mrb[0].mxu0
        %v281 = vadd.f32 0.0, %v280
        %v282 = vpop.f32.mrb[0].mxu0
        %v283 = vpop.f32.mrb[0].mxu0
        %v284 = vadd.f32 0.0, %v283
        %v285 = vpop.f32.mrb[0].mxu0
        %286 = vdwg.mxu0
        %v287 = vld [vmem:[#allocation2] sm:$0xff]
        %v288 = vld [vmem:[#allocation2 + $0x8] sm:$0xff]
        %v289 = vadd.f32 %v287, %v281
        %v290 = vadd.f32 %v288, %v284
        %291 = vst.msk [vmem:[#allocation2] sm:$0xff] %vm227, %v289
        %292 = vst.msk [vmem:[#allocation2 + $0x8] sm:$0xff] %vm227, %v290
        %v293 = vld [vmem:[%s168] sm:$0xf]
        %s294 = scalar_lea.vmem %s1, 16
        %v295 = vld [vmem:[%s294] sm:$0xf]
        %v296 = vld [vmem:[%s294 + $0x4] sm:$0xf]
        %v299 = vunpack.c.l.b16 %v295
        %v300 = vunpack.c.l.b16 %v296
        %v301 = vpack.c.b16 %v300, %v299
        %v303 = vunpack.c.l.b16 %v293
        %v304 = vpack.c.b16 %v303, %v303
        %305 = vrot.lane.b32.xlu0 %v304, 127
        %v306 = vpop.permute.xlu0 %305
        %v308 = vsel %vm178, %v301, 0
        %v311 = vsel %vm182, %v306, 0
        %313 = vmatprep.subr.bf16.mxu0 0
        %314 = vmatpush1.bf16.msra.mxu0 %v311
        %315 = vmatprep.subr.bf16.mxu0 0
        %316 = vmatpush1.bf16.msra.mxu0 0
        %317 = vmatprep.subr.bf16.mxu0 0
        %318 = vmatpush1.bf16.msra.mxu0 0
        %319 = vmatprep.subr.bf16.mxu0 0
        %320 = vmatpush1.bf16.msra.mxu0 0
        %321 = vmatprep.subr.bf16.mxu0 0
        %322 = vmatpush1.bf16.msra.mxu0 0
        %323 = vmatprep.subr.bf16.mxu0 0
        %324 = vmatpush1.bf16.msra.mxu0 0
        %325 = vmatprep.subr.bf16.mxu0 0
        %326 = vmatpush1.bf16.msra.mxu0 0
        %327 = vmatprep.subr.bf16.mxu0 0
        %328 = vmatpush1.bf16.msra.mxu0 0
        %329 = vmatprep.subr.bf16.mxu0 0
        %330 = vmatpush1.bf16.msra.mxu0 0
        %331 = vmatprep.subr.bf16.mxu0 0
        %332 = vmatpush1.bf16.msra.mxu0 0
        %333 = vmatprep.subr.bf16.mxu0 0
        %334 = vmatpush1.bf16.msra.mxu0 0
        %335 = vmatprep.subr.bf16.mxu0 0
        %336 = vmatpush1.bf16.msra.mxu0 0
        %337 = vmatprep.subr.bf16.mxu0 0
        %338 = vmatpush1.bf16.msra.mxu0 0
        %339 = vmatprep.subr.bf16.mxu0 0
        %340 = vmatpush1.bf16.msra.mxu0 0
        %341 = vmatprep.subr.bf16.mxu0 0
        %342 = vmatpush1.bf16.msra.mxu0 0
        %343 = vmatprep.subr.bf16.mxu0 0
        %344 = vmatpush1.bf16.msra.mxu0 0
        %345 = vmatprep.mubr.bf16.mxu0 0
        %346 = vmatmul.mubr.bf16.gmra.mrb[0].mxu0 %v308
        %v347 = vpop.f32.mrb[0].mxu0
        %v348 = vadd.f32 0.0, %v347
        %v349 = vpop.f32.mrb[0].mxu0
        %v350 = vpop.f32.mrb[0].mxu0
        %v351 = vadd.f32 0.0, %v350
        %v352 = vpop.f32.mrb[0].mxu0
        %353 = vdwg.mxu0
        %v354 = vld [vmem:[#allocation2] sm:$0xff]
        %v355 = vld [vmem:[#allocation2 + $0x8] sm:$0xff]
        %v356 = vadd.f32 %v354, %v348
        %v357 = vadd.f32 %v355, %v351
        %358 = vst.msk [vmem:[#allocation2] sm:$0xff] %vm227, %v356
        %359 = vst.msk [vmem:[#allocation2 + $0x8] sm:$0xff] %vm227, %v357
        %s360 = scalar_lea.vmem %s168, 8
        %v361 = vld [vmem:[%s360] sm:$0xf]
        %s362 = scalar_lea.vmem %s1, 24
        %v363 = vld [vmem:[%s362] sm:$0xf]
        %v364 = vld [vmem:[%s362 + $0x4] sm:$0xf]
        %v367 = vunpack.c.l.b16 %v363
        %v368 = vunpack.c.l.b16 %v364
        %v369 = vpack.c.b16 %v368, %v367
        %v371 = vsel %vm178, %v369, 0
        %v374 = vsel %vm182, %v361, 0
        %376 = vmatprep.subr.bf16.mxu0 0
        %377 = vmatpush1.bf16.msra.mxu0 %v374
        %378 = vmatprep.subr.bf16.mxu0 0
        %379 = vmatpush1.bf16.msra.mxu0 0
        %380 = vmatprep.subr.bf16.mxu0 0
        %381 = vmatpush1.bf16.msra.mxu0 0
        %382 = vmatprep.subr.bf16.mxu0 0
        %383 = vmatpush1.bf16.msra.mxu0 0
        %384 = vmatprep.subr.bf16.mxu0 0
        %385 = vmatpush1.bf16.msra.mxu0 0
        %386 = vmatprep.subr.bf16.mxu0 0
        %387 = vmatpush1.bf16.msra.mxu0 0
        %388 = vmatprep.subr.bf16.mxu0 0
        %389 = vmatpush1.bf16.msra.mxu0 0
        %390 = vmatprep.subr.bf16.mxu0 0
        %391 = vmatpush1.bf16.msra.mxu0 0
        %392 = vmatprep.subr.bf16.mxu0 0
        %393 = vmatpush1.bf16.msra.mxu0 0
        %394 = vmatprep.subr.bf16.mxu0 0
        %395 = vmatpush1.bf16.msra.mxu0 0
        %396 = vmatprep.subr.bf16.mxu0 0
        %397 = vmatpush1.bf16.msra.mxu0 0
        %398 = vmatprep.subr.bf16.mxu0 0
        %399 = vmatpush1.bf16.msra.mxu0 0
        %400 = vmatprep.subr.bf16.mxu0 0
        %401 = vmatpush1.bf16.msra.mxu0 0
        %402 = vmatprep.subr.bf16.mxu0 0
        %403 = vmatpush1.bf16.msra.mxu0 0
        %404 = vmatprep.subr.bf16.mxu0 0
        %405 = vmatpush1.bf16.msra.mxu0 0
        %406 = vmatprep.subr.bf16.mxu0 0
        %407 = vmatpush1.bf16.msra.mxu0 0
        %408 = vmatprep.mubr.bf16.mxu0 0
        %409 = vmatmul.mubr.bf16.gmra.mrb[0].mxu0 %v371
        %v410 = vpop.f32.mrb[0].mxu0
        %v411 = vadd.f32 0.0, %v410
        %v412 = vpop.f32.mrb[0].mxu0
        %v413 = vpop.f32.mrb[0].mxu0
        %v414 = vadd.f32 0.0, %v413
        %v415 = vpop.f32.mrb[0].mxu0
        %416 = vdwg.mxu0
        %v417 = vld [vmem:[#allocation2] sm:$0xff]
        %v418 = vld [vmem:[#allocation2 + $0x8] sm:$0xff]
        %v419 = vadd.f32 %v417, %v411
        %v420 = vadd.f32 %v418, %v414
        %421 = vst.msk [vmem:[#allocation2] sm:$0xff] %vm227, %v419
        %422 = vst.msk [vmem:[#allocation2 + $0x8] sm:$0xff] %vm227, %v420
        %s423 = scalar_lea.vmem %s168, 12
        %v424 = vld [vmem:[%s423] sm:$0xf]
        %s425 = scalar_lea.vmem %s1, 32
        %v426 = vld [vmem:[%s425] sm:$0xf]
        %v427 = vld [vmem:[%s425 + $0x4] sm:$0xf]
        %v430 = vunpack.c.l.b16 %v426
        %v431 = vunpack.c.l.b16 %v427
        %v432 = vpack.c.b16 %v431, %v430
        %v434 = vsel %vm178, %v432, 0
        %v437 = vsel %vm182, %v424, 0
        %439 = vmatprep.subr.bf16.mxu0 0
        %440 = vmatpush1.bf16.msra.mxu0 %v437
        %441 = vmatprep.subr.bf16.mxu0 0
        %442 = vmatpush1.bf16.msra.mxu0 0
        %443 = vmatprep.subr.bf16.mxu0 0
        %444 = vmatpush1.bf16.msra.mxu0 0
        %445 = vmatprep.subr.bf16.mxu0 0
        %446 = vmatpush1.bf16.msra.mxu0 0
        %447 = vmatprep.subr.bf16.mxu0 0
        %448 = vmatpush1.bf16.msra.mxu0 0
        %449 = vmatprep.subr.bf16.mxu0 0
        %450 = vmatpush1.bf16.msra.mxu0 0
        %451 = vmatprep.subr.bf16.mxu0 0
        %452 = vmatpush1.bf16.msra.mxu0 0
        %453 = vmatprep.subr.bf16.mxu0 0
        %454 = vmatpush1.bf16.msra.mxu0 0
        %455 = vmatprep.subr.bf16.mxu0 0
        %456 = vmatpush1.bf16.msra.mxu0 0
        %457 = vmatprep.subr.bf16.mxu0 0
        %458 = vmatpush1.bf16.msra.mxu0 0
        %459 = vmatprep.subr.bf16.mxu0 0
        %460 = vmatpush1.bf16.msra.mxu0 0
        %461 = vmatprep.subr.bf16.mxu0 0
        %462 = vmatpush1.bf16.msra.mxu0 0
        %463 = vmatprep.subr.bf16.mxu0 0
        %464 = vmatpush1.bf16.msra.mxu0 0
        %465 = vmatprep.subr.bf16.mxu0 0
        %466 = vmatpush1.bf16.msra.mxu0 0
        %467 = vmatprep.subr.bf16.mxu0 0
        %468 = vmatpush1.bf16.msra.mxu0 0
        %469 = vmatprep.subr.bf16.mxu0 0
        %470 = vmatpush1.bf16.msra.mxu0 0
        %471 = vmatprep.mubr.bf16.mxu0 0
        %472 = vmatmul.mubr.bf16.gmra.mrb[0].mxu0 %v434
        %v473 = vpop.f32.mrb[0].mxu0
        %v474 = vadd.f32 0.0, %v473
        %v475 = vpop.f32.mrb[0].mxu0
        %v476 = vpop.f32.mrb[0].mxu0
        %v477 = vadd.f32 0.0, %v476
        %v478 = vpop.f32.mrb[0].mxu0
        %479 = vdwg.mxu0
        %v480 = vld [vmem:[#allocation2] sm:$0xff]
        %v481 = vld [vmem:[#allocation2 + $0x8] sm:$0xff]
        %v482 = vadd.f32 %v480, %v474
        %v483 = vadd.f32 %v481, %v477
        %484 = vst.msk [vmem:[#allocation2] sm:$0xff] %vm227, %v482
        %485 = vst.msk [vmem:[#allocation2 + $0x8] sm:$0xff] %vm227, %v483
        %v486 = vld [vmem:[%s360] sm:$0xf]
        %s487 = scalar_lea.vmem %s1, 40
        %v488 = vld [vmem:[%s487] sm:$0xf]
        %v489 = vld [vmem:[%s487 + $0x4] sm:$0xf]
        %v492 = vunpack.c.l.b16 %v488
        %v493 = vunpack.c.l.b16 %v489
        %v494 = vpack.c.b16 %v493, %v492
        %v496 = vunpack.c.l.b16 %v486
        %v497 = vpack.c.b16 %v496, %v496
        %498 = vrot.lane.b32.xlu0 %v497, 127
        %v499 = vpop.permute.xlu0 %498
        %v501 = vsel %vm178, %v494, 0
        %v504 = vsel %vm182, %v499, 0
        %506 = vmatprep.subr.bf16.mxu0 0
        %507 = vmatpush1.bf16.msra.mxu0 %v504
        %508 = vmatprep.subr.bf16.mxu0 0
        %509 = vmatpush1.bf16.msra.mxu0 0
        %510 = vmatprep.subr.bf16.mxu0 0
        %511 = vmatpush1.bf16.msra.mxu0 0
        %512 = vmatprep.subr.bf16.mxu0 0
        %513 = vmatpush1.bf16.msra.mxu0 0
        %514 = vmatprep.subr.bf16.mxu0 0
        %515 = vmatpush1.bf16.msra.mxu0 0
        %516 = vmatprep.subr.bf16.mxu0 0
        %517 = vmatpush1.bf16.msra.mxu0 0
        %518 = vmatprep.subr.bf16.mxu0 0
        %519 = vmatpush1.bf16.msra.mxu0 0
        %520 = vmatprep.subr.bf16.mxu0 0
        %521 = vmatpush1.bf16.msra.mxu0 0
        %522 = vmatprep.subr.bf16.mxu0 0
        %523 = vmatpush1.bf16.msra.mxu0 0
        %524 = vmatprep.subr.bf16.mxu0 0
        %525 = vmatpush1.bf16.msra.mxu0 0
        %526 = vmatprep.subr.bf16.mxu0 0
        %527 = vmatpush1.bf16.msra.mxu0 0
        %528 = vmatprep.subr.bf16.mxu0 0
        %529 = vmatpush1.bf16.msra.mxu0 0
        %530 = vmatprep.subr.bf16.mxu0 0
        %531 = vmatpush1.bf16.msra.mxu0 0
        %532 = vmatprep.subr.bf16.mxu0 0
        %533 = vmatpush1.bf16.msra.mxu0 0
        %534 = vmatprep.subr.bf16.mxu0 0
        %535 = vmatpush1.bf16.msra.mxu0 0
        %536 = vmatprep.subr.bf16.mxu0 0
        %537 = vmatpush1.bf16.msra.mxu0 0
        %538 = vmatprep.mubr.bf16.mxu0 0
        %539 = vmatmul.mubr.bf16.gmra.mrb[0].mxu0 %v501
        %v540 = vpop.f32.mrb[0].mxu0
        %v541 = vadd.f32 0.0, %v540
        %v542 = vpop.f32.mrb[0].mxu0
        %v543 = vpop.f32.mrb[0].mxu0
        %v544 = vadd.f32 0.0, %v543
        %v545 = vpop.f32.mrb[0].mxu0
        %546 = vdwg.mxu0
        %v547 = vld [vmem:[#allocation2] sm:$0xff]
        %v548 = vld [vmem:[#allocation2 + $0x8] sm:$0xff]
        %v549 = vadd.f32 %v547, %v541
        %v550 = vadd.f32 %v548, %v544
        %551 = vst.msk [vmem:[#allocation2] sm:$0xff] %vm227, %v549
        %552 = vst.msk [vmem:[#allocation2 + $0x8] sm:$0xff] %vm227, %v550
        %v553 = vld [vmem:[%s168] sm:$0xf]
        %s554 = scalar_lea.vmem %s1, 48
        %v555 = vld [vmem:[%s554] sm:$0xf]
        %v556 = vld [vmem:[%s554 + $0x4] sm:$0xf]
        %v559 = vunpack.c.l.b16 %v555
        %v560 = vunpack.c.l.b16 %v556
        %v561 = vpack.c.b16 %v560, %v559
        %v563 = vunpack.c.l.b16 %v553
        %v564 = vpack.c.b16 %v563, %v563
        %565 = vrot.lane.b32.xlu0 %v564, 119
        %v566 = vpop.permute.xlu0 %565
        %v568 = vsel %vm178, %v561, 0
        %v571 = vsel %vm182, %v566, 0
        %573 = vmatprep.subr.bf16.mxu0 0
        %574 = vmatpush1.bf16.msra.mxu0 %v571
        %575 = vmatprep.subr.bf16.mxu0 0
        %576 = vmatpush1.bf16.msra.mxu0 0
        %577 = vmatprep.subr.bf16.mxu0 0
        %578 = vmatpush1.bf16.msra.mxu0 0
        %579 = vmatprep.subr.bf16.mxu0 0
        %580 = vmatpush1.bf16.msra.mxu0 0
        %581 = vmatprep.subr.bf16.mxu0 0
        %582 = vmatpush1.bf16.msra.mxu0 0
        %583 = vmatprep.subr.bf16.mxu0 0
        %584 = vmatpush1.bf16.msra.mxu0 0
        %585 = vmatprep.subr.bf16.mxu0 0
        %586 = vmatpush1.bf16.msra.mxu0 0
        %587 = vmatprep.subr.bf16.mxu0 0
        %588 = vmatpush1.bf16.msra.mxu0 0
        %589 = vmatprep.subr.bf16.mxu0 0
        %590 = vmatpush1.bf16.msra.mxu0 0
        %591 = vmatprep.subr.bf16.mxu0 0
        %592 = vmatpush1.bf16.msra.mxu0 0
        %593 = vmatprep.subr.bf16.mxu0 0
        %594 = vmatpush1.bf16.msra.mxu0 0
        %595 = vmatprep.subr.bf16.mxu0 0
        %596 = vmatpush1.bf16.msra.mxu0 0
        %597 = vmatprep.subr.bf16.mxu0 0
        %598 = vmatpush1.bf16.msra.mxu0 0
        %599 = vmatprep.subr.bf16.mxu0 0
        %600 = vmatpush1.bf16.msra.mxu0 0
        %601 = vmatprep.subr.bf16.mxu0 0
        %602 = vmatpush1.bf16.msra.mxu0 0
        %603 = vmatprep.subr.bf16.mxu0 0
        %604 = vmatpush1.bf16.msra.mxu0 0
        %605 = vmatprep.mubr.bf16.mxu0 0
        %606 = vmatmul.mubr.bf16.gmra.mrb[0].mxu0 %v568
        %v607 = vpop.f32.mrb[0].mxu0
        %v608 = vadd.f32 0.0, %v607
        %v609 = vpop.f32.mrb[0].mxu0
        %v610 = vpop.f32.mrb[0].mxu0
        %v611 = vadd.f32 0.0, %v610
        %v612 = vpop.f32.mrb[0].mxu0
        %613 = vdwg.mxu0
        %v614 = vld [vmem:[#allocation2] sm:$0xff]
        %v615 = vld [vmem:[#allocation2 + $0x8] sm:$0xff]
        %v616 = vadd.f32 %v614, %v608
        %v617 = vadd.f32 %v615, %v611
        %618 = vst.msk [vmem:[#allocation2] sm:$0xff] %vm227, %v616
        %619 = vst.msk [vmem:[#allocation2 + $0x8] sm:$0xff] %vm227, %v617
        %v620 = vld [vmem:[%s230] sm:$0xf]
        %s621 = scalar_lea.vmem %s1, 56
        %v622 = vld [vmem:[%s621] sm:$0xf]
        %v623 = vld [vmem:[%s621 + $0x4] sm:$0xf]
        %v626 = vunpack.c.l.b16 %v622
        %v627 = vunpack.c.l.b16 %v623
        %v628 = vpack.c.b16 %v627, %v626
        %v630 = vunpack.c.l.b16 %v620
        %v631 = vpack.c.b16 %v630, %v630
        %632 = vrot.lane.b32.xlu0 %v631, 119
        %v633 = vpop.permute.xlu0 %632
        %v635 = vsel %vm178, %v628, 0
        %v638 = vsel %vm182, %v633, 0
        %640 = vmatprep.subr.bf16.mxu0 0
        %641 = vmatpush1.bf16.msra.mxu0 %v638
        %642 = vmatprep.subr.bf16.mxu0 0
        %643 = vmatpush1.bf16.msra.mxu0 0
        %644 = vmatprep.subr.bf16.mxu0 0
        %645 = vmatpush1.bf16.msra.mxu0 0
        %646 = vmatprep.subr.bf16.mxu0 0
        %647 = vmatpush1.bf16.msra.mxu0 0
        %648 = vmatprep.subr.bf16.mxu0 0
        %649 = vmatpush1.bf16.msra.mxu0 0
        %650 = vmatprep.subr.bf16.mxu0 0
        %651 = vmatpush1.bf16.msra.mxu0 0
        %652 = vmatprep.subr.bf16.mxu0 0
        %653 = vmatpush1.bf16.msra.mxu0 0
        %654 = vmatprep.subr.bf16.mxu0 0
        %655 = vmatpush1.bf16.msra.mxu0 0
        %656 = vmatprep.subr.bf16.mxu0 0
        %657 = vmatpush1.bf16.msra.mxu0 0
        %658 = vmatprep.subr.bf16.mxu0 0
        %659 = vmatpush1.bf16.msra.mxu0 0
        %660 = vmatprep.subr.bf16.mxu0 0
        %661 = vmatpush1.bf16.msra.mxu0 0
        %662 = vmatprep.subr.bf16.mxu0 0
        %663 = vmatpush1.bf16.msra.mxu0 0
        %664 = vmatprep.subr.bf16.mxu0 0
        %665 = vmatpush1.bf16.msra.mxu0 0
        %666 = vmatprep.subr.bf16.mxu0 0
        %667 = vmatpush1.bf16.msra.mxu0 0
        %668 = vmatprep.subr.bf16.mxu0 0
        %669 = vmatpush1.bf16.msra.mxu0 0
        %670 = vmatprep.subr.bf16.mxu0 0
        %671 = vmatpush1.bf16.msra.mxu0 0
        %672 = vmatprep.mubr.bf16.mxu0 0
        %673 = vmatmul.mubr.bf16.gmra.mrb[0].mxu0 %v635
        %v674 = vpop.f32.mrb[0].mxu0
        %v675 = vadd.f32 0.0, %v674
        %v676 = vpop.f32.mrb[0].mxu0
        %v677 = vpop.f32.mrb[0].mxu0
        %v678 = vadd.f32 0.0, %v677
        %v679 = vpop.f32.mrb[0].mxu0
        %680 = vdwg.mxu0
        %v681 = vld [vmem:[#allocation2] sm:$0xff]
        %v682 = vld [vmem:[#allocation2 + $0x8] sm:$0xff]
        %v683 = vadd.f32 %v681, %v675
        %v684 = vadd.f32 %v682, %v678
        %685 = vst.msk [vmem:[#allocation2] sm:$0xff] %vm227, %v683
        %686 = vst.msk [vmem:[#allocation2 + $0x8] sm:$0xff] %vm227, %v684
        %v687 = vld [vmem:[%s168] sm:$0xf]
        %s688 = scalar_lea.vmem %s1, 64
        %v689 = vld [vmem:[%s688] sm:$0xf]
        %v690 = vld [vmem:[%s688 + $0x4] sm:$0xf]
        %v693 = vunpack.c.l.b16 %v689
        %v694 = vunpack.c.l.b16 %v690
        %v695 = vpack.c.b16 %v694, %v693
        %v697 = vunpack.c.l.b16 %v687
        %v698 = vpack.c.b16 %v697, %v697
        %699 = vrot.lane.b32.xlu0 %v698, 118
        %v700 = vpop.permute.xlu0 %699
        %v702 = vsel %vm178, %v695, 0
        %v705 = vsel %vm182, %v700, 0
        %707 = vmatprep.subr.bf16.mxu0 0
        %708 = vmatpush1.bf16.msra.mxu0 %v705
        %709 = vmatprep.subr.bf16.mxu0 0
        %710 = vmatpush1.bf16.msra.mxu0 0
        %711 = vmatprep.subr.bf16.mxu0 0
        %712 = vmatpush1.bf16.msra.mxu0 0
        %713 = vmatprep.subr.bf16.mxu0 0
        %714 = vmatpush1.bf16.msra.mxu0 0
        %715 = vmatprep.subr.bf16.mxu0 0
        %716 = vmatpush1.bf16.msra.mxu0 0
        %717 = vmatprep.subr.bf16.mxu0 0
        %718 = vmatpush1.bf16.msra.mxu0 0
        %719 = vmatprep.subr.bf16.mxu0 0
        %720 = vmatpush1.bf16.msra.mxu0 0
        %721 = vmatprep.subr.bf16.mxu0 0
        %722 = vmatpush1.bf16.msra.mxu0 0
        %723 = vmatprep.subr.bf16.mxu0 0
        %724 = vmatpush1.bf16.msra.mxu0 0
        %725 = vmatprep.subr.bf16.mxu0 0
        %726 = vmatpush1.bf16.msra.mxu0 0
        %727 = vmatprep.subr.bf16.mxu0 0
        %728 = vmatpush1.bf16.msra.mxu0 0
        %729 = vmatprep.subr.bf16.mxu0 0
        %730 = vmatpush1.bf16.msra.mxu0 0
        %731 = vmatprep.subr.bf16.mxu0 0
        %732 = vmatpush1.bf16.msra.mxu0 0
        %733 = vmatprep.subr.bf16.mxu0 0
        %734 = vmatpush1.bf16.msra.mxu0 0
        %735 = vmatprep.subr.bf16.mxu0 0
        %736 = vmatpush1.bf16.msra.mxu0 0
        %737 = vmatprep.subr.bf16.mxu0 0
        %738 = vmatpush1.bf16.msra.mxu0 0
        %739 = vmatprep.mubr.bf16.mxu0 0
        %740 = vmatmul.mubr.bf16.gmra.mrb[0].mxu0 %v702
        %v741 = vpop.f32.mrb[0].mxu0
        %v742 = vadd.f32 0.0, %v741
        %v743 = vpop.f32.mrb[0].mxu0
        %v744 = vpop.f32.mrb[0].mxu0
        %v745 = vadd.f32 0.0, %v744
        %v746 = vpop.f32.mrb[0].mxu0
        %747 = vdwg.mxu0
        %v748 = vld [vmem:[#allocation2] sm:$0xff]
        %v749 = vld [vmem:[#allocation2 + $0x8] sm:$0xff]
        %v750 = vadd.f32 %v748, %v742
        %v751 = vadd.f32 %v749, %v745
        %752 = vst.msk [vmem:[#allocation2] sm:$0xff] %vm227, %v750
        %753 = vst.msk [vmem:[#allocation2 + $0x8] sm:$0xff] %vm227, %v751
        %v754 = vld [vmem:[#allocation2] sm:$0xff]
        %v755 = vld [vmem:[#allocation2 + $0x8] sm:$0xff]
        %v756 = vld [vmem:[%s2] sm:$0xff]
        %v757 = vld [vmem:[%s2 + $0x8] sm:$0xff]
        %759 = vset.pattern.permute.xlu0 0
        %760 = vperm.xlu0 %759, %v756
        %v761 = vpop.permute.xlu0 %760
        %764 = vset.pattern.permute.xlu0 0
        %765 = vperm.xlu0 %764, %v757
        %v766 = vpop.permute.xlu0 %765
        %v768 = vadd.f32 %v754, %v761
        %v769 = vadd.f32 %v755, %v766
        %v770 = vxor.u32 %v768, 2147483648
        %v771 = vxor.u32 %v769, 2147483648
        %v772 = vmul.f32 %v770, 1.442695
        %v773 = vpow.pop %v772
        %v774 = vmul.f32 %v771, 1.442695
        %v775 = vpow.pop %v774
        %v776 = vadd.f32 %v773, 1.0
        %v777 = vadd.f32 %v775, 1.0
        %v778 = vrcp.pop %v776
        %v779 = vmul.f32 1.0, %v778
        %v780 = vrcp.pop %v777
        %v781 = vmul.f32 1.0, %v780
        %v782 = vmul.f32 %v768, %v779
        %v783 = vmul.f32 %v769, %v781
        %v784 = vpack.c.bf16 %v783, %v782
        %v786 = vunpack.c.l.b16 %v784
        %v787 = vunpack.c.h.b16 %v784
        %v788 = vpack.c.b16 %v786, %v786
        %v789 = vpack.c.b16 %v787, %v787
        %vm792 = vcmask 584704
        %793 = vst.msk [vmem:[%s163] sm:$0xf] %vm792, %v788
        %794 = vst.msk [vmem:[%s163 + $0x4] sm:$0xf] %vm792, %v789
        %s795 = sand.u32 %s93, 1
        %s796 = scalar_lea.sflag [#allocation4], %s795
        %s797 = sand.u32 %s93, 1
        %s798 = smul.addr %s797, 8
        %s799 = scalar_lea.vmem [#allocation3], %s798
        // Predicated region
        $region33: #{tpu_custom_call.1} parent=31 // pred_check
          %p800 = pneg %p103
        $region34: #{tpu_custom_call.1} parent=31 // pred_check_branch
          %802 = sbr.rel (%p800) target = $region36
        $region35: #{tpu_custom_call.1} parent=31 // pred_region
          %s804 = ssub.s32 128, 128
          %805 = vsyncadd %s796, %s804
          %s806 = smul.addr %s17, 2
          %s807 = smul.addr %s806, 64
          %s808 = scalar_lea.hbm %s3, %s807
          %s809 = sshll.u32 %s799, 4
          %s810 = int_to_ptr.vmem [resolvable:$true] %s809
          %815 = dma.vmem_to_hbm [thread:$0]  %s810, 128, %s808, %s796, 64, 64, 4
        $region36: #{tpu_custom_call.1} parent=31 // pred_fallthru
          _
      $region32: #{tpu_custom_call.1} parent=5 // pred_fallthru
        _
      %p816 = scmp.le.s32.totalorder 2, %s12
      // Predicated region
      $region37: #{tpu_custom_call.1} parent=5 // pred_check
        %p817 = pneg %p816
      $region38: #{tpu_custom_call.1} parent=5 // pred_check_branch
        %819 = sbr.rel (%p817) target = $region40
      $region39: #{tpu_custom_call.1} parent=5 // pred_region
        %s820 = ssub.s32 %s12, 2
        // Predicated region
        $region41: #{tpu_custom_call.1} parent=39 // pred_check
          %p821 = pneg %p109
        $region42: #{tpu_custom_call.1} parent=39 // pred_check_branch
          %823 = sbr.rel (%p821) target = $region44
        $region43: #{tpu_custom_call.1} parent=39 // pred_region
          %s824 = sand.u32 %s94, 1
          %s825 = scalar_lea.sflag [#allocation4], %s824
          %s826 = sand.u32 %s94, 1
          %s827 = smul.addr %s826, 8
          %s828 = scalar_lea.vmem [#allocation3], %s827
          %829 = dma.done %s825, 128
        $region44: #{tpu_custom_call.1} parent=39 // pred_fallthru
          _
      $region40: #{tpu_custom_call.1} parent=5 // pred_fallthru
        _
    $region6: #{tpu_custom_call.1} parent=1 // loop_footer
      %s16 = sadd.s32 1, %s12
    $region7: #{tpu_custom_call.1} parent=1 // loop_footer_branch
      %11 = sbr.rel target = $region3
    $region8: #{tpu_custom_call.1} parent=1 // loop_exit
      _
    %830 = vsyncpa [#allocation4], 1
    %s831 = scalar_lea.sflag [#allocation4], 1
    %832 = vsyncpa %s831, 1

</llo_original>
